<compile_context>
chip_gen: v7x
topology: tpu7x:2x2x1
jax: 0.10.0
libtpu: 0.0.40
codegen_flags: <defaults>
</compile_context>

<pallas_src>
import functools

import jax
import jax.numpy as jnp
from jax.experimental import pallas as pl
from jax.experimental.pallas import tpu as pltpu

MAX_PERIOD = 10000.0

_TARGET_OUT_BLOCK_BYTES = 2 << 20     # ~2 MiB output block per grid step
_WORKING_SET_BUDGET = 12 << 20        # stay well under v5e's 16 MiB scoped VMEM
_SPLIT_OUT_BYTES = 1 << 20            # force >=2 grid steps past this output size


def _round_up(x: int, m: int) -> int:
    return ((x + m - 1) // m) * m


def _sincos_shared(x):
    """sin(x), cos(x) with one shared range reduction (f32, VPU-only).

    k = round(x * 2/pi); r = x - k*pi/2 via 3-part Cody-Waite; short minimax
    polynomials on |r| <= pi/4; quadrant rotation shared by both outputs.
    Accurate to ~1e-6 abs for |x| up to ~1e5 (timesteps are O(1e3)).
    """
    k = jnp.floor(x * 0.6366197723675814 + 0.5)          # round(x * 2/pi)
    r = x - k * 1.5703125                                  # pi/2 head (exact mul)
    r = r - k * 4.837512969970703125e-4                    # pi/2 mid
    r = r - k * 7.54978995489188216e-8                     # pi/2 tail
    z = r * r
    sin_r = r + r * z * (-1.6666654611e-1
                         + z * (8.3321608736e-3
                                + z * (-1.9515295891e-4)))
    cos_r = (1.0 - 0.5 * z
             + z * z * (4.166664568298827e-2
                        + z * (-1.388731625493765e-3
                               + z * 2.443315711809948e-5)))
    q = k - 4.0 * jnp.floor(k * 0.25)                      # k mod 4, exact in f32
    sin_x = jnp.where(q == 0.0, sin_r,
             jnp.where(q == 1.0, cos_r,
              jnp.where(q == 2.0, -sin_r, -cos_r)))
    cos_x = jnp.where(q == 0.0, cos_r,
             jnp.where(q == 1.0, -sin_r,
              jnp.where(q == 2.0, -cos_r, sin_r)))
    return sin_x, cos_x


def _timesteps_kernel(t_ref, f_ref, o_ref, *, flip_sin_to_cos: bool,
                      aligned_half: bool):
    # t_ref: (blk_n, 1) f32   -- timestep column for this row tile
    # f_ref: (1, half) f32    -- constant frequency table
    # o_ref: (blk_n, 2*half) f32
    half = f_ref.shape[1]
    # (blk_n,1) * (1,half) -> (blk_n,half); plain VPU broadcast multiply
    # (kept off the MXU -- trivial FLOPs, MRF/MRB drain not worth it).
    emb = t_ref[...] * f_ref[...]
    sin_e, cos_e = _sincos_shared(emb)
    first, second = (cos_e, sin_e) if flip_sin_to_cos else (sin_e, cos_e)
    if aligned_half:
        # half is a multiple of 128: two lane-aligned unmasked slice stores,
        # no extra VMEM intermediate and no cross-lane concat copy.
        o_ref[:, :half] = first
        o_ref[:, half:] = second
    else:
        # TODO(synk): for half % 128 != 0 a chunked store with a single masked
        # boundary splice would avoid this XLU concat entirely; the single
        # full-width store below at least writes each lane tile exactly once
        # instead of hitting it twice with masked vst.msk.
        o_ref[...] = jnp.concatenate([first, second], axis=-1)


def _choose_tile_n(n: int, even: int) -> int:
    """Row tile sized for ~2 MiB output blocks and a <=12 MiB working set."""
    padded_c = _round_up(even, 128)                 # output lane padding
    padded_half = _round_up(max(even // 2, 1), 128)  # intermediate lane padding
    # Rows so one (lane-padded) output block stays near the 2 MiB target ...
    rows_out = max(8, _TARGET_OUT_BLOCK_BYTES // (padded_c * 4))
    # ... and the full working set (2x double-buffered output blocks, 2x
    # lane-padded timestep columns, ~4 half-wide f32 intermediates for the
    # shared sin/cos) stays under the budget on every generation.
    bytes_per_row = 2 * padded_c * 4 + 2 * 128 * 4 + 4 * padded_half * 4
    rows_ws = max(8, _WORKING_SET_BUDGET // bytes_per_row)
    tile = max(8, (min(rows_out, rows_ws) // 8) * 8)
    if n <= tile:
        return n                                    # single block, full dim (legal)
    return tile


def timesteps_embedding(timesteps: jax.Array,
                        num_channels: int,
                        flip_sin_to_cos: bool = True,
                        *,
                        tile_n: int | None = None) -> jax.Array:
    """Equivalent of Timesteps.forward for 1-D `timesteps` (float32 output)."""
    assert timesteps.ndim == 1, f"Expected 1D tensor, got {timesteps.shape}"
    assert num_channels >= 2, "num_channels must be >= 2"

    n = timesteps.shape[0]
    half = num_channels // 2
    even = 2 * half

    t2d = timesteps.astype(jnp.float32).reshape(n, 1)

    # Compile-time constant frequency table, hoisted out of the kernel.
    # NOTE: divides by half_dim exactly as the spec module does
    # (downscale_freq_shift=0 style); plumb a shift arg if a config needs it.
    freqs = jnp.exp(
        -jnp.log(jnp.float32(MAX_PERIOD))
        * jnp.arange(half, dtype=jnp.float32) / jnp.float32(half)
    ).reshape(1, half)

    if tile_n is not None:
        assert tile_n > 0, "tile_n must be positive"
        blk_n = min(n, _round_up(tile_n, 8))        # legal: multiple of 8 or == n
    else:
        blk_n = _choose_tile_n(n, even)
        # Ensure >=2 grid steps on non-trivial calls so both v7x TensorCores
        # run ("parallel" axis); one extra ~0.35 us step on v5e/v6e.
        if blk_n == n and n >= 16 and n * even * 4 >= _SPLIT_OUT_BYTES:
            blk_n = min(blk_n, _round_up(pl.cdiv(n, 2), 8))
    blk_n = min(blk_n, n)

    grid = (pl.cdiv(n, blk_n),)
    aligned_half = (half % 128 == 0)

    cost = pl.CostEstimate(
        flops=n * half * 36,                  # broadcast mul + shared sin/cos poly
        transcendentals=0,                    # no EUP ops; all VPU polynomial
        bytes_accessed=4 * (n + half + n * even),
    )

    # TODO(synk): if profiling on v6e shows exposed output-writeback DMA at
    # small `even`, bump out_specs to pipeline_mode=pl.Buffered(3) rather than
    # growing blk_n.
    out = pl.pallas_call(
        functools.partial(_timesteps_kernel,
                          flip_sin_to_cos=flip_sin_to_cos,
                          aligned_half=aligned_half),
        out_shape=jax.ShapeDtypeStruct((n, even), jnp.float32),
        grid_spec=pltpu.PrefetchScalarGridSpec(
            num_scalar_prefetch=0,
            grid=grid,
            in_specs=[
                pl.BlockSpec((blk_n, 1), lambda i: (i, 0)),   # timestep column
                pl.BlockSpec((1, half), lambda i: (0, 0)),    # constant freqs
            ],
            out_specs=pl.BlockSpec((blk_n, even), lambda i: (i, 0)),
        ),
        compiler_params=pltpu.CompilerParams(
            dimension_semantics=("parallel",),   # shard row tiles across TCs (v7x)
        ),
        cost_estimate=cost,
    )(t2d, freqs)

    if num_channels % 2 == 1:
        # odd channel count: pad one zero column on the right (glue, not hot path)
        out = jnp.pad(out, ((0, 0), (0, 1)))
    return out


def _reference(timesteps, num_channels, flip_sin_to_cos=True):
    """Pure-JAX reference mirroring the PyTorch forward exactly."""
    half_dim = num_channels // 2
    exponent = -jnp.log(MAX_PERIOD) * jnp.arange(0, half_dim, dtype=jnp.float32)
    exponent = exponent / half_dim
    emb = jnp.exp(exponent)
    emb = emb[None, :] * timesteps.astype(jnp.float32)[:, None]
    emb = jnp.concatenate([jnp.sin(emb), jnp.cos(emb)], axis=-1)
    if flip_sin_to_cos:
        emb = jnp.concatenate([emb[:, half_dim:], emb[:, :half_dim]], axis=-1)
    if num_channels % 2 == 1:
        emb = jnp.pad(emb, ((0, 0), (0, 1)))
    return emb


if __name__ == "__main__":
    key = jax.random.PRNGKey(0)

    # --- demo case (module-typical small shapes, C < 128 -> concat-store path) ---
    num_channels = 32
    batch = 8
    timesteps = jax.random.uniform(key, (batch,), dtype=jnp.float32) * 1000.0
    out = jax.block_until_ready(
        timesteps_embedding(timesteps, num_channels, flip_sin_to_cos=True))
    ref = _reference(timesteps, num_channels, flip_sin_to_cos=True)
    assert out.shape == (batch, num_channels), out.shape
    assert jnp.allclose(out, ref, atol=3e-5, rtol=1e-5), "mismatch (flip=True)"

    # --- ragged grid + non-multiple-of-8 user tile_n (rounded to 96, 6 steps) ---
    n2, c2 = 520, 64
    ts2 = jax.random.uniform(jax.random.PRNGKey(1), (n2,), dtype=jnp.float32) * 1000.0
    out2 = jax.block_until_ready(
        timesteps_embedding(ts2, c2, flip_sin_to_cos=True, tile_n=90))
    ref2 = _reference(ts2, c2, flip_sin_to_cos=True)
    assert out2.shape == (n2, c2), out2.shape
    assert jnp.allclose(out2, ref2, atol=3e-5, rtol=1e-5), "mismatch (ragged grid)"

    # --- lane-aligned halves + forced >=2 parallel steps + flip=False path ---
    n3, c3 = 1024, 256
    ts3 = jax.random.uniform(jax.random.PRNGKey(2), (n3,), dtype=jnp.float32) * 1000.0
    out3 = jax.block_until_ready(
        timesteps_embedding(ts3, c3, flip_sin_to_cos=False))
    ref3 = _reference(ts3, c3, flip_sin_to_cos=False)
    assert out3.shape == (n3, c3), out3.shape
    assert jnp.allclose(out3, ref3, atol=3e-5, rtol=1e-5), "mismatch (aligned/flip=False)"

    print("KERNEL_OK")
</pallas_src>

<mosaic_0001>
module attributes {stable_mosaic.version = 11 : i64} {
  func.func @_timesteps_kernel(%arg0: i32, %arg1: memref<8x1xf32, #tpu.memory_space<vmem>>, %arg2: memref<1x16xf32, #tpu.memory_space<vmem>>, %arg3: memref<8x32xf32, #tpu.memory_space<vmem>>) attributes {dimension_semantics = [#tpu.dimension_semantics<parallel>], iteration_bounds = array<i64: 1>, scalar_prefetch = 0 : i64, scratch_operands = 0 : i64, tpu.core_type = #tpu.core_type<tc>, window_params = [{transform_indices = @transform_0, window_bounds = array<i64: 8, 1>}, {pipeline_mode = #tpu.pipeline_mode<synchronous>, transform_indices = @transform_1, window_bounds = array<i64: 1, 16>}, {transform_indices = @transform_2, window_bounds = array<i64: 8, 32>}]} {
    %c0 = arith.constant 0 : index
    %c0_0 = arith.constant 0 : index
    %0 = vector.load %arg1[%c0, %c0_0] : memref<8x1xf32, #tpu.memory_space<vmem>>, vector<8x1xf32>
    %c0_1 = arith.constant 0 : index
    %c0_2 = arith.constant 0 : index
    %1 = vector.load %arg2[%c0_1, %c0_2] : memref<1x16xf32, #tpu.memory_space<vmem>>, vector<1x16xf32>
    %2 = vector.broadcast %0 : vector<8x1xf32> to vector<8x16xf32>
    %3 = vector.broadcast %1 : vector<1x16xf32> to vector<8x16xf32>
    %4 = arith.mulf %2, %3 : vector<8x16xf32>
    %cst = arith.constant 0.636619746 : f32
    %5 = vector.broadcast %cst : f32 to vector<8x16xf32>
    %6 = arith.mulf %4, %5 : vector<8x16xf32>
    %cst_3 = arith.constant 5.000000e-01 : f32
    %7 = vector.broadcast %cst_3 : f32 to vector<8x16xf32>
    %8 = arith.addf %6, %7 : vector<8x16xf32>
    %9 = math.floor %8 : vector<8x16xf32>
    %cst_4 = arith.constant 1.5703125 : f32
    %10 = vector.broadcast %cst_4 : f32 to vector<8x16xf32>
    %11 = arith.mulf %9, %10 : vector<8x16xf32>
    %12 = arith.subf %4, %11 : vector<8x16xf32>
    %cst_5 = arith.constant 4.83751297E-4 : f32
    %13 = vector.broadcast %cst_5 : f32 to vector<8x16xf32>
    %14 = arith.mulf %9, %13 : vector<8x16xf32>
    %15 = arith.subf %12, %14 : vector<8x16xf32>
    %cst_6 = arith.constant 7.549790e-08 : f32
    %16 = vector.broadcast %cst_6 : f32 to vector<8x16xf32>
    %17 = arith.mulf %9, %16 : vector<8x16xf32>
    %18 = arith.subf %15, %17 : vector<8x16xf32>
    %19 = arith.mulf %18, %18 : vector<8x16xf32>
    %20 = arith.mulf %18, %19 : vector<8x16xf32>
    %cst_7 = arith.constant -1.95152956E-4 : f32
    %21 = vector.broadcast %cst_7 : f32 to vector<8x16xf32>
    %22 = arith.mulf %19, %21 : vector<8x16xf32>
    %cst_8 = arith.constant 0.00833216123 : f32
    %23 = vector.broadcast %cst_8 : f32 to vector<8x16xf32>
    %24 = arith.addf %23, %22 : vector<8x16xf32>
    %25 = arith.mulf %19, %24 : vector<8x16xf32>
    %cst_9 = arith.constant -0.166666552 : f32
    %26 = vector.broadcast %cst_9 : f32 to vector<8x16xf32>
    %27 = arith.addf %26, %25 : vector<8x16xf32>
    %28 = arith.mulf %20, %27 : vector<8x16xf32>
    %29 = arith.addf %18, %28 : vector<8x16xf32>
    %cst_10 = arith.constant 5.000000e-01 : f32
    %30 = vector.broadcast %cst_10 : f32 to vector<8x16xf32>
    %31 = arith.mulf %30, %19 : vector<8x16xf32>
    %cst_11 = arith.constant 1.000000e+00 : f32
    %32 = vector.broadcast %cst_11 : f32 to vector<8x16xf32>
    %33 = arith.subf %32, %31 : vector<8x16xf32>
    %34 = arith.mulf %19, %19 : vector<8x16xf32>
    %cst_12 = arith.constant 2.44331568E-5 : f32
    %35 = vector.broadcast %cst_12 : f32 to vector<8x16xf32>
    %36 = arith.mulf %19, %35 : vector<8x16xf32>
    %cst_13 = arith.constant -0.00138873165 : f32
    %37 = vector.broadcast %cst_13 : f32 to vector<8x16xf32>
    %38 = arith.addf %37, %36 : vector<8x16xf32>
    %39 = arith.mulf %19, %38 : vector<8x16xf32>
    %cst_14 = arith.constant 0.0416666456 : f32
    %40 = vector.broadcast %cst_14 : f32 to vector<8x16xf32>
    %41 = arith.addf %40, %39 : vector<8x16xf32>
    %42 = arith.mulf %34, %41 : vector<8x16xf32>
    %43 = arith.addf %33, %42 : vector<8x16xf32>
    %cst_15 = arith.constant 2.500000e-01 : f32
    %44 = vector.broadcast %cst_15 : f32 to vector<8x16xf32>
    %45 = arith.mulf %9, %44 : vector<8x16xf32>
    %46 = math.floor %45 : vector<8x16xf32>
    %cst_16 = arith.constant 4.000000e+00 : f32
    %47 = vector.broadcast %cst_16 : f32 to vector<8x16xf32>
    %48 = arith.mulf %47, %46 : vector<8x16xf32>
    %49 = arith.subf %9, %48 : vector<8x16xf32>
    %cst_17 = arith.constant 0.000000e+00 : f32
    %50 = vector.broadcast %cst_17 : f32 to vector<8x16xf32>
    %51 = arith.cmpf oeq, %49, %50 : vector<8x16xf32>
    %cst_18 = arith.constant 1.000000e+00 : f32
    %52 = vector.broadcast %cst_18 : f32 to vector<8x16xf32>
    %53 = arith.cmpf oeq, %49, %52 : vector<8x16xf32>
    %cst_19 = arith.constant 2.000000e+00 : f32
    %54 = vector.broadcast %cst_19 : f32 to vector<8x16xf32>
    %55 = arith.cmpf oeq, %49, %54 : vector<8x16xf32>
    %cst_20 = arith.constant 0.000000e+00 : f32
    %56 = vector.broadcast %cst_20 : f32 to vector<8x16xf32>
    %57 = arith.subf %56, %29 : vector<8x16xf32>
    %cst_21 = arith.constant 0.000000e+00 : f32
    %58 = vector.broadcast %cst_21 : f32 to vector<8x16xf32>
    %59 = arith.subf %58, %43 : vector<8x16xf32>
    %60 = arith.select %55, %57, %59 : vector<8x16xi1>, vector<8x16xf32>
    %61 = arith.select %53, %43, %60 : vector<8x16xi1>, vector<8x16xf32>
    %62 = arith.select %51, %29, %61 : vector<8x16xi1>, vector<8x16xf32>
    %cst_22 = arith.constant 0.000000e+00 : f32
    %63 = vector.broadcast %cst_22 : f32 to vector<8x16xf32>
    %64 = arith.cmpf oeq, %49, %63 : vector<8x16xf32>
    %cst_23 = arith.constant 1.000000e+00 : f32
    %65 = vector.broadcast %cst_23 : f32 to vector<8x16xf32>
    %66 = arith.cmpf oeq, %49, %65 : vector<8x16xf32>
    %cst_24 = arith.constant 0.000000e+00 : f32
    %67 = vector.broadcast %cst_24 : f32 to vector<8x16xf32>
    %68 = arith.subf %67, %29 : vector<8x16xf32>
    %cst_25 = arith.constant 2.000000e+00 : f32
    %69 = vector.broadcast %cst_25 : f32 to vector<8x16xf32>
    %70 = arith.cmpf oeq, %49, %69 : vector<8x16xf32>
    %cst_26 = arith.constant 0.000000e+00 : f32
    %71 = vector.broadcast %cst_26 : f32 to vector<8x16xf32>
    %72 = arith.subf %71, %43 : vector<8x16xf32>
    %73 = arith.select %70, %72, %29 : vector<8x16xi1>, vector<8x16xf32>
    %74 = arith.select %66, %68, %73 : vector<8x16xi1>, vector<8x16xf32>
    %75 = arith.select %64, %43, %74 : vector<8x16xi1>, vector<8x16xf32>
    %76 = tpu.concatenate %75, %62 in 1 : vector<8x16xf32>, vector<8x16xf32> -> vector<8x32xf32>
    %c0_27 = arith.constant 0 : index
    %c0_28 = arith.constant 0 : index
    %77 = vector.load %arg3[%c0_27, %c0_28] : memref<8x32xf32, #tpu.memory_space<vmem>>, vector<8x32xf32>
    tpu.vector_store %arg3[%c0_27, %c0_28], %76 {strides = array<i32>} : memref<8x32xf32, #tpu.memory_space<vmem>>, vector<8x32xf32>,
    return
  }
  func.func @transform_0(%arg0: i32) -> (i32, i32) {
    %c0_i32 = arith.constant 0 : i32
    %c0_i32_0 = arith.constant 0 : i32
    return %arg0, %c0_i32 : i32, i32
  }
  func.func @transform_1(%arg0: i32) -> (i32, i32) {
    %c0_i32 = arith.constant 0 : i32
    %c0_i32_0 = arith.constant 0 : i32
    %c0_i32_1 = arith.constant 0 : i32
    return %c0_i32, %c0_i32_0 : i32, i32
  }
  func.func @transform_2(%arg0: i32) -> (i32, i32) {
    %c0_i32 = arith.constant 0 : i32
    %c0_i32_0 = arith.constant 0 : i32
    return %arg0, %c0_i32 : i32, i32
  }
}

</mosaic_0001>

<llo_original>
// kernel: tpu_custom_call.1
$region0: #{tpu_custom_call.1}
  #allocation0 [shape = 'u32[]', space=smem, size = 0x4, offset = 0x4, fixed_abs, tag = 'smem constant byte address 0x4 - core index']
  #allocation1 [shape = 'u32[144,128]{1,0:T(1,128)}', space=vmem, size = 0x12000, scoped, tag = 'internal scratch']
  %s0 = inlined_call_operand.vmem [shape: f32[8,1], index: 0, kind: input, shape index: {}]
  %s1 = inlined_call_operand.vmem [shape: f32[1,16], index: 1, kind: input, shape index: {}]
  %s2 = inlined_call_operand.hbm [shape: f32[8,32], index: 2, kind: output, shape index: {}]
  %s3 = sld [smem:[#allocation0]]
  $region18: #{tpu_custom_call.1} parent=0
    _
  %s5 = ssub.s32 1, %s3
  %s6 = scalar_select 0, %s5, %s3
  $region1: #{tpu_custom_call.1} parent=0
    #allocation2 [shape = 'u8[4096]{0}', space=vmem, size = 0x1000, scoped, tag = 'output window, operand 0, single buffered']
    #allocation3 [shape = 's32[1]{0}', space=sflag, size = 0x4, scoped, tag = 'scoped memory for tpu_custom_call.1']
    %7 = vsyncpa [#allocation3], 0
    // Predicated region
    $region2: #{tpu_custom_call.1} parent=1 // pred_check
      _
    $region3: #{tpu_custom_call.1} parent=1 // pred_check_branch
      %9 = sbr.rel (0) target = $region5
    $region4: #{tpu_custom_call.1} parent=1 // pred_region
      _
    $region5: #{tpu_custom_call.1} parent=1 // pred_fallthru
      _
    // Predicated region
    $region6: #{tpu_custom_call.1} parent=1 // pred_check
      _
    $region7: #{tpu_custom_call.1} parent=1 // pred_check_branch
      %11 = sbr.rel (0) target = $region9
    $region8: #{tpu_custom_call.1} parent=1 // pred_region
      _
    $region9: #{tpu_custom_call.1} parent=1 // pred_fallthru
      _
    %v12 = vld [vmem:[%s0] sm:$0xff]
    %v13 = vld [vmem:[%s1] sm:$0x1]
    %15 = vset.pattern.permute.xlu0 0
    %16 = vperm.xlu0 %15, %v12
    %v17 = vpop.permute.xlu0 %16
    %v20 = vlaneseq
    %v21 = vshrl.u32 %v20, 7
    %v22 = vsub.s32 0, %v21
    %v23 = vrot.slane %v13, %v22
    %v25 = vmul.f32 %v17, %v23
    %v26 = vmul.f32 %v25, 0.63661975
    %v27 = vadd.f32 %v26, 0.5
    %v28 = vfloor.f32 %v27
    %v29 = vmul.f32 %v28, 1.5703125
    %v30 = vsub.f32 %v25, %v29
    %v31 = vmul.f32 %v28, 0.0004837513
    %v32 = vsub.f32 %v30, %v31
    %v33 = vmul.f32 %v28, 7.54979e-08
    %v34 = vsub.f32 %v32, %v33
    %v35 = vmul.f32 %v34, %v34
    %v36 = vmul.f32 %v34, %v35
    %v37 = vmul.f32 %v35, -0.00019515296
    %v38 = vadd.f32 %v37, 0.008332161
    %v39 = vmul.f32 %v35, %v38
    %v40 = vadd.f32 %v39, -0.16666655
    %v41 = vmul.f32 %v36, %v40
    %v42 = vadd.f32 %v34, %v41
    %v43 = vmul.f32 %v35, 0.5
    %v44 = vsub.f32 1.0, %v43
    %v45 = vmul.f32 %v35, %v35
    %v46 = vmul.f32 %v35, 2.4433157e-05
    %v47 = vadd.f32 %v46, -0.0013887316
    %v48 = vmul.f32 %v35, %v47
    %v49 = vadd.f32 %v48, 0.041666646
    %v50 = vmul.f32 %v45, %v49
    %v51 = vadd.f32 %v44, %v50
    %v52 = vmul.f32 %v28, 0.25
    %v53 = vfloor.f32 %v52
    %v54 = vmul.f32 %v53, 4.0
    %v55 = vsub.f32 %v28, %v54
    %vm56 = vcmp.eq.f32.partialorder %v55, 0.0
    %vm57 = vcmp.eq.f32.partialorder %v55, 1.0
    %vm58 = vcmp.eq.f32.partialorder %v55, 2.0
    %v59 = vsub.f32 0.0, %v42
    %v60 = vsub.f32 0.0, %v51
    %v61 = vsel %vm58, %v59, %v60
    %v62 = vsel %vm57, %v51, %v61
    %v63 = vsel %vm56, %v42, %v62
    %v64 = vsel %vm58, %v60, %v42
    %v65 = vsel %vm57, %v59, %v64
    %v66 = vsel %vm56, %v51, %v65
    %68 = vrot.lane.b32.xlu0 %v63, 16
    %v69 = vpop.permute.xlu0 %68
    %vm71 = vcmask 130048
    %v72 = vsel %vm71, %v66, %v69
    %vm73 = vcmask 261120
    %74 = vst.msk [vmem:[#allocation2] sm:$0xff] %vm73, %v72
    // Predicated region
    $region10: #{tpu_custom_call.1} parent=1 // pred_check
      _
    $region11: #{tpu_custom_call.1} parent=1 // pred_check_branch
      %76 = sbr.rel (0) target = $region13
    $region12: #{tpu_custom_call.1} parent=1 // pred_region
      %s78 = ssub.s32 128, 128
      %79 = vsyncadd [#allocation3], %s78
      %s81 = sshll.u32 [#allocation2], 4
      %s82 = int_to_ptr.vmem [resolvable:$true] %s81
      %84 = dma.vmem_to_hbm [thread:$0]  %s82, 128, %s2, [#allocation3]
    $region13: #{tpu_custom_call.1} parent=1 // pred_fallthru
      _
    // Predicated region
    $region14: #{tpu_custom_call.1} parent=1 // pred_check
      _
    $region15: #{tpu_custom_call.1} parent=1 // pred_check_branch
      %86 = sbr.rel (0) target = $region17
    $region16: #{tpu_custom_call.1} parent=1 // pred_region
      %87 = dma.done [#allocation3], 128
    $region17: #{tpu_custom_call.1} parent=1 // pred_fallthru
      _
    %88 = vsyncpa [#allocation3], 1

</llo_original>
